<compile_context>
chip_gen: v7x
topology: tpu7x:2x2x1
jax: 0.10.0
libtpu: 0.0.40
codegen_flags: <defaults>
</compile_context>

<pallas_src>
import jax
import jax.numpy as jnp
from jax.experimental import pallas as pl
from jax.experimental.pallas import tpu as pltpu


# ---------------------------------------------------------------------------
# Helpers
# ---------------------------------------------------------------------------

def _round_up(x, m):
    return ((x + m - 1) // m) * m


def _sublane_pack(dtype):
    # packed sublane tile height: f32 -> 8, bf16 -> 16, int8/fp8 -> 32
    return 8 * (4 // jnp.dtype(dtype).itemsize)


def _vmem_capacity_bytes():
    """Per-TensorCore VMEM capacity; conservative 64 MiB fallback (v7x)."""
    try:
        info = pltpu.get_tpu_info()
        cap = getattr(info, "vmem_capacity_bytes", None)
        if cap:
            return int(cap)
    except Exception:
        pass
    return 64 * 1024 * 1024


def _patchify(x, temporal_patch_size, spatial_patch_size):
    """'b c (t r) (h m) (w n) -> (b t h w) (c r m n)' as reshape + transpose."""
    B, C, T, H, W = x.shape
    pt, ps = temporal_patch_size, spatial_patch_size
    t, h, w = T // pt, H // ps, W // ps
    x = x.reshape(B, C, t, pt, h, ps, w, ps)
    x = x.transpose(0, 2, 4, 6, 1, 3, 5, 7)            # b t h w c r m n
    # TODO(synk): fold this rearrange into the kernel's input BlockSpec/index_map
    # over (b, t, h, w) to eliminate one full HBM pass over the activations.
    return x.reshape(B * t * h * w, C * pt * ps * ps), (B, t, h, w)


# ---------------------------------------------------------------------------
# Kernels: one (tm, K) row tile x resident (K, N) weight -> (tm, N) output tile
# ---------------------------------------------------------------------------

def _proj_bias_kernel(x_ref, w_ref, b_ref, o_ref):
    acc = jnp.dot(x_ref[...], w_ref[...], preferred_element_type=jnp.float32)
    o_ref[...] = (acc + b_ref[...]).astype(o_ref.dtype)


def _proj_nobias_kernel(x_ref, w_ref, o_ref):
    o_ref[...] = jnp.dot(x_ref[...], w_ref[...],
                         preferred_element_type=jnp.float32).astype(o_ref.dtype)


# ---------------------------------------------------------------------------
# Wrapper
# ---------------------------------------------------------------------------

def patch_embed_forward(x, weight, bias, *, spatial_patch_size,
                        temporal_patch_size, legacy_patch_emb=True,
                        out_dtype=None, tm=None):
    """Pallas PatchEmbed forward.

    x:      (B, C, T, H, W)
    weight: (O, C, pt, ps, ps) if legacy_patch_emb (Conv3d weight, kernel == stride)
            (O, K)             otherwise           (nn.Linear weight), K = C*pt*ps*ps
    bias:   (O,) or None
    returns (B, T//pt, H//ps, W//ps, O)   -- 'b t h w c' (keep_spatio=True)
    """
    del legacy_patch_emb  # both module paths reduce to the same GEMM
    assert x.ndim == 5
    B, C, T, H, W = x.shape
    ps, pt = spatial_patch_size, temporal_patch_size
    assert T % pt == 0 and H % ps == 0 and W % ps == 0

    patches, (_, t, h, w) = _patchify(x, pt, ps)       # (M, K)
    M, K = patches.shape
    O = weight.shape[0]
    N = O
    out_dtype = jnp.dtype(out_dtype) if out_dtype is not None else x.dtype

    # bf16 x bf16 with f32 accumulation is the native single-pass MXU mode on
    # all generations; cast once in the wrapper, never per-step in the kernel.
    if weight.dtype == jnp.bfloat16 or x.dtype == jnp.bfloat16:
        compute_dtype = jnp.bfloat16
    else:
        compute_dtype = x.dtype
    # Conv3d weight (O, C, pt, ps, ps) and Linear weight (O, K) flatten
    # identically in (c r m n) order -> one GEMM serves both module paths.
    w2d = weight.reshape(O, K).T.astype(compute_dtype)          # (K, N), VMEM-resident
    patches = patches.astype(compute_dtype)
    b2d = None if bias is None else bias.astype(jnp.float32).reshape(1, N)

    in_isz = jnp.dtype(compute_dtype).itemsize
    out_isz = jnp.dtype(out_dtype).itemsize
    sub = max(_sublane_pack(compute_dtype), _sublane_pack(out_dtype))

    # ---- tile sizing: weight + bias resident, stream large row tiles ----
    vmem_cap = _vmem_capacity_bytes()
    K_pad = _round_up(K, 128)                                   # lane padding of x tile
    resident = _round_up(K, sub) * N * in_isz + (0 if b2d is None else N * 4)
    per_row = 2 * (N * out_isz + K_pad * in_isz)                # dbl-buffered out + x
    budget = int(0.70 * vmem_cap) - 2 * resident
    tm_cap = max(sub, (max(budget, 0) // per_row // sub) * sub)

    if tm is None:
        tm = 2048
        if M > 2 * sub:              # >= 2 row tiles so both v7x TCs get work
            tm = min(tm, _round_up(-(-M // 2), sub))
    tm = max(sub, (min(tm, tm_cap) // sub) * sub)
    tm = min(tm, _round_up(M, sub))            # no block larger than the array
    grid_m = pl.cdiv(M, tm)                    # partial last block is masked

    needed = tm * per_row + 2 * resident
    vmem_limit = int(min(0.9 * vmem_cap, max(needed + (8 << 20), 32 << 20)))
    compiler_params = pltpu.CompilerParams(
        dimension_semantics=("parallel",),
        vmem_limit_bytes=vmem_limit,
    )

    cost = pl.CostEstimate(
        flops=2 * M * K * N,
        transcendentals=0,
        bytes_accessed=(M * K * in_isz + K * N * in_isz
                        + (0 if b2d is None else N * 4)
                        + M * N * out_isz),
    )

    x_spec = pl.BlockSpec((tm, K), lambda i: (i, 0))
    w_spec = pl.BlockSpec((K, N), lambda i: (0, 0))    # constant block -> no re-DMA
    out_spec = pl.BlockSpec((tm, N), lambda i: (i, 0))

    if b2d is not None:
        b_spec = pl.BlockSpec((1, N), lambda i: (0, 0))
        out_flat = pl.pallas_call(
            _proj_bias_kernel,
            out_shape=jax.ShapeDtypeStruct((M, N), out_dtype),
            grid=(grid_m,),
            in_specs=[x_spec, w_spec, b_spec],
            out_specs=out_spec,
            compiler_params=compiler_params,
            cost_estimate=cost,
        )(patches, w2d, b2d)
    else:
        out_flat = pl.pallas_call(
            _proj_nobias_kernel,
            out_shape=jax.ShapeDtypeStruct((M, N), out_dtype),
            grid=(grid_m,),
            in_specs=[x_spec, w_spec],
            out_specs=out_spec,
            compiler_params=compiler_params,
            cost_estimate=cost,
        )(patches, w2d)

    return out_flat.reshape(B, t, h, w, N)


# ---------------------------------------------------------------------------
# Pure-JAX references
# ---------------------------------------------------------------------------

def _reference_patch_embed(x, weight, bias, *, spatial_patch_size,
                           temporal_patch_size):
    patches, (B, t, h, w) = _patchify(x, temporal_patch_size, spatial_patch_size)
    O = weight.shape[0]
    w2d = weight.reshape(O, -1).astype(jnp.float32)
    y = jnp.dot(patches.astype(jnp.float32), w2d.T,
                precision=jax.lax.Precision.HIGHEST)
    if bias is not None:
        y = y + bias.astype(jnp.float32)
    return y.reshape(B, t, h, w, O).astype(x.dtype)


if __name__ == "__main__":
    key = jax.random.PRNGKey(0)
    B, C, T, H, W = 2, 4, 2, 16, 16
    pt, ps = 1, 2                       # temporal / spatial patch sizes
    O = 256                             # out_channels (lane-aligned)
    K = C * pt * ps * ps                # 16

    kx, kw, kb, kwc, kbc = jax.random.split(key, 5)
    x = jax.random.normal(kx, (B, C, T, H, W), jnp.float32)

    # --- non-legacy path: Rearrange + nn.Linear(K, O, bias=True) ---
    lim = 1.0 / jnp.sqrt(K)
    w_lin = (jax.random.uniform(kw, (O, K), jnp.float32) * 2 - 1) * lim
    b_lin = (jax.random.uniform(kb, (O,), jnp.float32) * 2 - 1) * lim
    y = patch_embed_forward(x, w_lin, b_lin, spatial_patch_size=ps,
                            temporal_patch_size=pt, legacy_patch_emb=False)
    jax.block_until_ready(y)
    assert y.shape == (B, T // pt, H // ps, W // ps, O)
    y_ref = _reference_patch_embed(x, w_lin, b_lin, spatial_patch_size=ps,
                                   temporal_patch_size=pt)
    assert jnp.allclose(y, y_ref, atol=1e-3, rtol=1e-3)

    # --- same path with a tile size that does NOT divide M (masked last block) ---
    y_part = patch_embed_forward(x, w_lin, b_lin, spatial_patch_size=ps,
                                 temporal_patch_size=pt, legacy_patch_emb=False,
                                 tm=96)
    jax.block_until_ready(y_part)
    assert jnp.allclose(y_part, y_ref, atol=1e-3, rtol=1e-3)

    # --- legacy path: Conv3d(kernel=stride=(pt, ps, ps), bias=True) ---
    limc = 1.0 / jnp.sqrt(C * pt * ps * ps)
    w_conv = (jax.random.uniform(kwc, (O, C, pt, ps, ps), jnp.float32) * 2 - 1) * limc
    b_conv = (jax.random.uniform(kbc, (O,), jnp.float32) * 2 - 1) * limc
    y2 = patch_embed_forward(x, w_conv, b_conv, spatial_patch_size=ps,
                             temporal_patch_size=pt, legacy_patch_emb=True)
    jax.block_until_ready(y2)
    # Independent reference: the actual strided 3-D convolution.
    conv = jax.lax.conv_general_dilated(
        x, w_conv, window_strides=(pt, ps, ps), padding="VALID",
        dimension_numbers=("NCDHW", "OIDHW", "NCDHW"),
        precision=jax.lax.Precision.HIGHEST)
    conv = jnp.transpose(conv, (0, 2, 3, 4, 1)) + b_conv
    assert y2.shape == conv.shape
    assert jnp.allclose(y2, conv, atol=1e-3, rtol=1e-3)

    # --- bf16 weights, bias-free specialized kernel, bf16 output ---
    y3 = patch_embed_forward(x, w_lin.astype(jnp.bfloat16), None,
                             spatial_patch_size=ps, temporal_patch_size=pt,
                             legacy_patch_emb=False, out_dtype=jnp.bfloat16)
    jax.block_until_ready(y3)
    assert y3.dtype == jnp.bfloat16
    patches_ref, _ = _patchify(x, pt, ps)
    y3_ref = jnp.dot(patches_ref.astype(jnp.bfloat16),
                     w_lin.astype(jnp.bfloat16).T,
                     preferred_element_type=jnp.float32
                     ).reshape(B, T // pt, H // ps, W // ps, O)
    assert jnp.allclose(y3.astype(jnp.float32), y3_ref, atol=2e-2, rtol=2e-2)

    print("KERNEL_OK")
</pallas_src>

<mosaic_0001>
module attributes {stable_mosaic.version = 11 : i64} {
  func.func @_proj_bias_kernel(%arg0: i32, %arg1: memref<128x16xf32, #tpu.memory_space<vmem>>, %arg2: memref<16x256xf32, #tpu.memory_space<vmem>>, %arg3: memref<1x256xf32, #tpu.memory_space<vmem>>, %arg4: memref<128x256xf32, #tpu.memory_space<vmem>>) attributes {dimension_semantics = [#tpu.dimension_semantics<parallel>], iteration_bounds = array<i64: 2>, scalar_prefetch = 0 : i64, scratch_operands = 0 : i64, tpu.core_type = #tpu.core_type<tc>, window_params = [{transform_indices = @transform_0, window_bounds = array<i64: 128, 16>}, {pipeline_mode = #tpu.pipeline_mode<synchronous>, transform_indices = @transform_1, window_bounds = array<i64: 16, 256>}, {pipeline_mode = #tpu.pipeline_mode<synchronous>, transform_indices = @transform_2, window_bounds = array<i64: 1, 256>}, {transform_indices = @transform_3, window_bounds = array<i64: 128, 256>}]} {
    %c0 = arith.constant 0 : index
    %c0_0 = arith.constant 0 : index
    %0 = vector.load %arg1[%c0, %c0_0] : memref<128x16xf32, #tpu.memory_space<vmem>>, vector<128x16xf32>
    %c0_1 = arith.constant 0 : index
    %c0_2 = arith.constant 0 : index
    %1 = vector.load %arg2[%c0_1, %c0_2] : memref<16x256xf32, #tpu.memory_space<vmem>>, vector<16x256xf32>
    %cst = arith.constant dense<0.000000e+00> : vector<128x256xf32>
    %2 = tpu.matmul %0, %1, %cst {dimension_numbers = #tpu.dot_dimension_numbers<[1], [0], [0], [1], [0, 0, 1, 1], [], []>} : vector<128x16xf32>, vector<16x256xf32>, vector<128x256xf32> -> vector<128x256xf32>
    %c0_3 = arith.constant 0 : index
    %c0_4 = arith.constant 0 : index
    %3 = vector.load %arg3[%c0_3, %c0_4] : memref<1x256xf32, #tpu.memory_space<vmem>>, vector<1x256xf32>
    %4 = vector.broadcast %3 : vector<1x256xf32> to vector<128x256xf32>
    %5 = arith.addf %2, %4 : vector<128x256xf32>
    %c0_5 = arith.constant 0 : index
    %c0_6 = arith.constant 0 : index
    %6 = vector.load %arg4[%c0_5, %c0_6] : memref<128x256xf32, #tpu.memory_space<vmem>>, vector<128x256xf32>
    tpu.vector_store %arg4[%c0_5, %c0_6], %5 {strides = array<i32>} : memref<128x256xf32, #tpu.memory_space<vmem>>, vector<128x256xf32>,
    return
  }
  func.func @transform_0(%arg0: i32) -> (i32, i32) {
    %c0_i32 = arith.constant 0 : i32
    %c0_i32_0 = arith.constant 0 : i32
    return %arg0, %c0_i32 : i32, i32
  }
  func.func @transform_1(%arg0: i32) -> (i32, i32) {
    %c0_i32 = arith.constant 0 : i32
    %c0_i32_0 = arith.constant 0 : i32
    %c0_i32_1 = arith.constant 0 : i32
    return %c0_i32, %c0_i32_0 : i32, i32
  }
  func.func @transform_2(%arg0: i32) -> (i32, i32) {
    %c0_i32 = arith.constant 0 : i32
    %c0_i32_0 = arith.constant 0 : i32
    %c0_i32_1 = arith.constant 0 : i32
    return %c0_i32, %c0_i32_0 : i32, i32
  }
  func.func @transform_3(%arg0: i32) -> (i32, i32) {
    %c0_i32 = arith.constant 0 : i32
    %c0_i32_0 = arith.constant 0 : i32
    return %arg0, %c0_i32 : i32, i32
  }
}

</mosaic_0001>

<llo_original>
// kernel: tpu_custom_call.1
$region0: #{tpu_custom_call.1}
  #allocation0 [shape = 'u32[]', space=smem, size = 0x4, offset = 0x4, fixed_abs, tag = 'smem constant byte address 0x4 - core index']
  #allocation1 [shape = 'u32[144,128]{1,0:T(1,128)}', space=vmem, size = 0x12000, scoped, tag = 'internal scratch']
  %s0 = inlined_call_operand.vmem [shape: f32[256,16], index: 0, kind: input, shape index: {}]
  %s1 = inlined_call_operand.vmem [shape: f32[16,256], index: 1, kind: input, shape index: {}]
  %s2 = inlined_call_operand.vmem [shape: f32[1,256], index: 2, kind: input, shape index: {}]
  %s3 = inlined_call_operand.hbm [shape: f32[256,256], index: 3, kind: output, shape index: {}]
  %s4 = sld [smem:[#allocation0]]
  $region45: #{tpu_custom_call.1} parent=0
    _
  %s6 = ssub.s32 1, %s4
  %s7 = scalar_select 0, %s6, %s4
  $region1: #{tpu_custom_call.1} parent=0
    #allocation2 [shape = 'u8[262144]{0}', space=vmem, size = 0x40000, scoped, tag = 'output window, operand 0']
    #allocation3 [shape = 's32[2]{0}', space=sflag, size = 0x8, scoped, tag = 'scoped memory for tpu_custom_call.1']
    %8 = vsyncpa [#allocation3], 0
    %s9 = scalar_lea.sflag [#allocation3], 1
    %10 = vsyncpa %s9, 0
    loop: start=0, step=1, limit=4
    $region2: #{tpu_custom_call.1} parent=1 // loop_pre_header
      _
    $region3: #{tpu_custom_call.1} parent=1 // loop_header
      %s12 = sphi 0, %s16
      %p13 = scmp.ge.s32.totalorder %s12, 4
      %s22 = sphi 0, %s24
      %s25 = sphi 0, %s22
      %s26 = sphi 0, %s25
      %s42 = sphi 0, %s26
      %s46 = sphi 0, %s46
      %s48 = sphi 0, %s46
      %s49 = sphi 0, %s48
      %s63 = sphi 0, %s49
      %s67 = sphi 0, %s67
      %s69 = sphi 0, %s67
      %s70 = sphi 0, %s69
      %s84 = sphi 0, %s70
      %s90 = sphi 0, %s92
      %s93 = sphi 0, %s90
      %s94 = sphi 0, %s93
      %s110 = sphi 0, %s94
    $region4: #{tpu_custom_call.1} parent=1 // loop_header_branch
      %15 = sbr.rel (%p13) target = $region8
    $region5: #{tpu_custom_call.1} parent=1 // loop_body
      %s17 = ssub.s32 %s12, 1
      %s18 = ssub.s32 %s12, 2
      %s19 = sadd.s32 %s12, 1
      %s20 = ssub.s32 %s12, %s19
      %p21 = scmp.eq.s32.totalorder %s20, 0
      %s23 = sadd.s32 %s22, 1
      %s24 = scalar_select %p21, %s22, %s23
      %p27 = pneg %p21
      %p28 = scmp.eq.s32.totalorder %s12, 1
      %p29 = por %p27, %p28
      %p30 = scmp.ne.s32.totalorder %s22, %s25
      %p31 = scmp.eq.s32.totalorder %s12, 0
      %p32 = por %p30, %p31
      %p33 = scmp.ne.s32.totalorder %s22, %s25
      %p34 = scmp.eq.s32.totalorder %s17, 1
      %p35 = por %p33, %p34
      %p36 = scmp.ne.s32.totalorder %s25, %s26
      %p37 = scmp.eq.s32.totalorder %s17, 0
      %p38 = por %p36, %p37
      %p39 = scmp.ne.s32.totalorder %s25, %s26
      %p40 = scmp.eq.s32.totalorder %s18, 1
      %p41 = por %p39, %p40
      %p43 = scmp.ne.s32.totalorder %s26, %s42
      %p44 = scmp.eq.s32.totalorder %s18, 0
      %p45 = por %p43, %p44
      %s47 = sadd.s32 %s46, 1
      %p50 = scmp.eq.s32.totalorder %s12, 1
      %p51 = scmp.ne.s32.totalorder %s46, %s48
      %p52 = scmp.eq.s32.totalorder %s12, 0
      %p53 = por %p51, %p52
      %p54 = scmp.ne.s32.totalorder %s46, %s48
      %p55 = scmp.eq.s32.totalorder %s17, 1
      %p56 = por %p54, %p55
      %p57 = scmp.ne.s32.totalorder %s48, %s49
      %p58 = scmp.eq.s32.totalorder %s17, 0
      %p59 = por %p57, %p58
      %p60 = scmp.ne.s32.totalorder %s48, %s49
      %p61 = scmp.eq.s32.totalorder %s18, 1
      %p62 = por %p60, %p61
      %p64 = scmp.ne.s32.totalorder %s49, %s63
      %p65 = scmp.eq.s32.totalorder %s18, 0
      %p66 = por %p64, %p65
      %s68 = sadd.s32 %s67, 1
      %p71 = scmp.eq.s32.totalorder %s12, 1
      %p72 = scmp.ne.s32.totalorder %s67, %s69
      %p73 = scmp.eq.s32.totalorder %s12, 0
      %p74 = por %p72, %p73
      %p75 = scmp.ne.s32.totalorder %s67, %s69
      %p76 = scmp.eq.s32.totalorder %s17, 1
      %p77 = por %p75, %p76
      %p78 = scmp.ne.s32.totalorder %s69, %s70
      %p79 = scmp.eq.s32.totalorder %s17, 0
      %p80 = por %p78, %p79
      %p81 = scmp.ne.s32.totalorder %s69, %s70
      %p82 = scmp.eq.s32.totalorder %s18, 1
      %p83 = por %p81, %p82
      %p85 = scmp.ne.s32.totalorder %s70, %s84
      %p86 = scmp.eq.s32.totalorder %s18, 0
      %p87 = por %p85, %p86
      %s88 = ssub.s32 %s12, %s19
      %p89 = scmp.eq.s32.totalorder %s88, 0
      %s91 = sadd.s32 %s90, 1
      %s92 = scalar_select %p89, %s90, %s91
      %p95 = pneg %p89
      %p96 = scmp.eq.s32.totalorder %s12, 1
      %p97 = por %p95, %p96
      %p98 = scmp.ne.s32.totalorder %s90, %s93
      %p99 = scmp.eq.s32.totalorder %s12, 0
      %p100 = por %p98, %p99
      %p101 = scmp.ne.s32.totalorder %s90, %s93
      %p102 = scmp.eq.s32.totalorder %s17, 1
      %p103 = por %p101, %p102
      %p104 = scmp.ne.s32.totalorder %s93, %s94
      %p105 = scmp.eq.s32.totalorder %s17, 0
      %p106 = por %p104, %p105
      %p107 = scmp.ne.s32.totalorder %s93, %s94
      %p108 = scmp.eq.s32.totalorder %s18, 1
      %p109 = por %p107, %p108
      %p111 = scmp.ne.s32.totalorder %s94, %s110
      %p112 = scmp.eq.s32.totalorder %s18, 0
      %p113 = por %p111, %p112
      %p114 = scmp.le.s32.totalorder 1, %s12
      %p115 = scmp.lt.s32.totalorder %s12, 3
      %p116 = pnand %p114, %p115
      %p117 = pneg %p116
      // Predicated region
      $region9: #{tpu_custom_call.1} parent=5 // pred_check
        _
      $region10: #{tpu_custom_call.1} parent=5 // pred_check_branch
        %119 = sbr.rel (%p116) target = $region12
      $region11: #{tpu_custom_call.1} parent=5 // pred_region
        %s120 = ssub.s32 %s12, 1
        // Predicated region
        $region13: #{tpu_custom_call.1} parent=11 // pred_check
          %p121 = pneg %p59
        $region14: #{tpu_custom_call.1} parent=11 // pred_check_branch
          %123 = sbr.rel (%p121) target = $region16
        $region15: #{tpu_custom_call.1} parent=11 // pred_region
          _
        $region16: #{tpu_custom_call.1} parent=11 // pred_fallthru
          _
        // Predicated region
        $region17: #{tpu_custom_call.1} parent=11 // pred_check
          %p124 = pneg %p80
        $region18: #{tpu_custom_call.1} parent=11 // pred_check_branch
          %126 = sbr.rel (%p124) target = $region20
        $region19: #{tpu_custom_call.1} parent=11 // pred_region
          _
        $region20: #{tpu_custom_call.1} parent=11 // pred_fallthru
          _
      $region12: #{tpu_custom_call.1} parent=5 // pred_fallthru
        _
      %p127 = scmp.lt.s32.totalorder %s12, 2
      // Predicated region
      $region21: #{tpu_custom_call.1} parent=5 // pred_check
        %p128 = pneg %p127
      $region22: #{tpu_custom_call.1} parent=5 // pred_check_branch
        %130 = sbr.rel (%p128) target = $region24
      $region23: #{tpu_custom_call.1} parent=5 // pred_region
        // Predicated region
        $region25: #{tpu_custom_call.1} parent=23 // pred_check
          %p131 = pneg %p32
        $region26: #{tpu_custom_call.1} parent=23 // pred_check_branch
          %133 = sbr.rel (%p131) target = $region28
        $region27: #{tpu_custom_call.1} parent=23 // pred_region
          %s134 = smul.u32 16, %s12
          %p135 = scmp.lt.s32.totalorder %s134, 31
          %s136 = scalar_select %p135, %s134, 31
          %s137 = smul.addr %s136, 8
          %s138 = scalar_lea.vmem %s0, %s137
          %s139 = smul.u32 16, %s12
        $region28: #{tpu_custom_call.1} parent=23 // pred_fallthru
          _
      $region24: #{tpu_custom_call.1} parent=5 // pred_fallthru
        _
      %p140 = scmp.le.s32.totalorder 1, %s12
      %p141 = scmp.lt.s32.totalorder %s12, 3
      %p142 = pnand %p140, %p141
      %p143 = pneg %p142
      // Predicated region
      $region29: #{tpu_custom_call.1} parent=5 // pred_check
        _
      $region30: #{tpu_custom_call.1} parent=5 // pred_check_branch
        %145 = sbr.rel (%p142) target = $region32
      $region31: #{tpu_custom_call.1} parent=5 // pred_region
        %s146 = ssub.s32 %s12, 1
        %s147 = smul.u32 16, %s17
        %p148 = scmp.lt.s32.totalorder %s147, 31
        %s149 = scalar_select %p148, %s147, 31
        %s150 = smul.addr %s149, 8
        %s151 = scalar_lea.vmem %s0, %s150
        %p152 = pneg %p38
        %p153 = pneg %p35
        %p154 = pneg %p59
        %p155 = pneg %p56
        %p156 = pneg %p80
        %p157 = pneg %p77
        %p158 = pneg %p106
        %p159 = pneg %p103
        %s160 = sand.u32 %s93, 1
        %s161 = scalar_lea.sflag [#allocation3], %s160
        %s162 = sand.u32 %s93, 1
        %s163 = smul.addr %s162, 256
        %s164 = scalar_lea.vmem [#allocation2], %s163
        %s165 = smul.u32 16, %s17
        %p166 = scmp.lt.s32.totalorder %s165, 31
        %s167 = scalar_select %p166, %s165, 31
        %s168 = smul.addr %s167, 8
        %s169 = scalar_lea.vmem %s0, %s168
        %s170 = smul.u32 16, %s17
        %s171 = smul.u32 16, %s17
        %v172 = vld [vmem:[%s169] sm:$0xff]
        %v173 = vld [vmem:[%s169 + $0x8] sm:$0xff]
        %v174 = vld [vmem:[%s169 + $0x10] sm:$0xff]
        %v175 = vld [vmem:[%s169 + $0x18] sm:$0xff]
        %v176 = vld [vmem:[%s169 + $0x20] sm:$0xff]
        %v177 = vld [vmem:[%s169 + $0x28] sm:$0xff]
        %v178 = vld [vmem:[%s169 + $0x30] sm:$0xff]
        %v179 = vld [vmem:[%s169 + $0x38] sm:$0xff]
        %v180 = vld [vmem:[%s169 + $0x40] sm:$0xff]
        %v181 = vld [vmem:[%s169 + $0x48] sm:$0xff]
        %v182 = vld [vmem:[%s169 + $0x50] sm:$0xff]
        %v183 = vld [vmem:[%s169 + $0x58] sm:$0xff]
        %v184 = vld [vmem:[%s169 + $0x60] sm:$0xff]
        %v185 = vld [vmem:[%s169 + $0x68] sm:$0xff]
        %v186 = vld [vmem:[%s169 + $0x70] sm:$0xff]
        %v187 = vld [vmem:[%s169 + $0x78] sm:$0xff]
        %v188 = vld [vmem:[%s1] sm:$0xff]
        %v189 = vld [vmem:[%s1 + $0x8] sm:$0xff]
        %v190 = vld [vmem:[%s1 + $0x10] sm:$0xff]
        %v191 = vld [vmem:[%s1 + $0x18] sm:$0xff]
        %v192 = vld [vmem:[%s2] sm:$0x3]
        %v194 = vlaneseq
        %v195 = vshrl.u32 %v194, 7
        %v196 = vsub.s32 0, %v195
        %v197 = vrot.slane %v192, %v196
        %v198 = vlaneseq
        %v199 = vshrl.u32 %v198, 7
        %v200 = vsub.s32 1, %v199
        %v201 = vrot.slane %v192, %v200
        %vm204 = vcmask 130048
        %v206 = vsel %vm204, %v172, 0
        %v209 = vsel %vm204, %v173, 0
        %v212 = vsel %vm204, %v174, 0
        %v215 = vsel %vm204, %v175, 0
        %v218 = vsel %vm204, %v176, 0
        %v221 = vsel %vm204, %v177, 0
        %v224 = vsel %vm204, %v178, 0
        %v227 = vsel %vm204, %v179, 0
        %v230 = vsel %vm204, %v180, 0
        %v233 = vsel %vm204, %v181, 0
        %v236 = vsel %vm204, %v182, 0
        %v239 = vsel %vm204, %v183, 0
        %v242 = vsel %vm204, %v184, 0
        %v245 = vsel %vm204, %v185, 0
        %v248 = vsel %vm204, %v186, 0
        %v251 = vsel %vm204, %v187, 0
        %253 = vmatprep.subr.mxu0 %v189
        %254 = vmatpush1.msra.mxu0 %v188
        %255 = vmatprep.subr.mxu0 %v191
        %256 = vmatpush1.msra.mxu0 %v190
        %257 = vmatprep.subr.mxu0 0.0
        %258 = vmatpush1.msra.mxu0 0.0
        %259 = vmatprep.subr.mxu0 0.0
        %260 = vmatpush1.msra.mxu0 0.0
        %261 = vmatprep.subr.mxu0 0.0
        %262 = vmatpush1.msra.mxu0 0.0
        %263 = vmatprep.subr.mxu0 0.0
        %264 = vmatpush1.msra.mxu0 0.0
        %265 = vmatprep.subr.mxu0 0.0
        %266 = vmatpush1.msra.mxu0 0.0
        %267 = vmatprep.subr.mxu0 0.0
        %268 = vmatpush1.msra.mxu0 0.0
        %269 = vmatprep.subr.mxu0 0.0
        %270 = vmatpush1.msra.mxu0 0.0
        %271 = vmatprep.subr.mxu0 0.0
        %272 = vmatpush1.msra.mxu0 0.0
        %273 = vmatprep.subr.mxu0 0.0
        %274 = vmatpush1.msra.mxu0 0.0
        %275 = vmatprep.subr.mxu0 0.0
        %276 = vmatpush1.msra.mxu0 0.0
        %277 = vmatprep.subr.mxu0 0.0
        %278 = vmatpush1.msra.mxu0 0.0
        %279 = vmatprep.subr.mxu0 0.0
        %280 = vmatpush1.msra.mxu0 0.0
        %281 = vmatprep.subr.mxu0 0.0
        %282 = vmatpush1.msra.mxu0 0.0
        %283 = vmatprep.subr.mxu0 0.0
        %284 = vmatpush1.msra.mxu0 0.0
        %285 = vmatprep.subr.mxu0 0.0
        %286 = vmatpush1.msra.mxu0 0.0
        %287 = vmatprep.subr.mxu0 0.0
        %288 = vmatpush1.msra.mxu0 0.0
        %289 = vmatprep.subr.mxu0 0.0
        %290 = vmatpush1.msra.mxu0 0.0
        %291 = vmatprep.subr.mxu0 0.0
        %292 = vmatpush1.msra.mxu0 0.0
        %293 = vmatprep.subr.mxu0 0.0
        %294 = vmatpush1.msra.mxu0 0.0
        %295 = vmatprep.subr.mxu0 0.0
        %296 = vmatpush1.msra.mxu0 0.0
        %297 = vmatprep.subr.mxu0 0.0
        %298 = vmatpush1.msra.mxu0 0.0
        %299 = vmatprep.subr.mxu0 0.0
        %300 = vmatpush1.msra.mxu0 0.0
        %301 = vmatprep.subr.mxu0 0.0
        %302 = vmatpush1.msra.mxu0 0.0
        %303 = vmatprep.subr.mxu0 0.0
        %304 = vmatpush1.msra.mxu0 0.0
        %305 = vmatprep.subr.mxu0 0.0
        %306 = vmatpush1.msra.mxu0 0.0
        %307 = vmatprep.subr.mxu0 0.0
        %308 = vmatpush1.msra.mxu0 0.0
        %309 = vmatprep.subr.mxu0 0.0
        %310 = vmatpush1.msra.mxu0 0.0
        %311 = vmatprep.subr.mxu0 0.0
        %312 = vmatpush1.msra.mxu0 0.0
        %313 = vmatprep.subr.mxu0 0.0
        %314 = vmatpush1.msra.mxu0 0.0
        %315 = vmatprep.subr.mxu0 0.0
        %316 = vmatpush1.msra.mxu0 0.0
        %317 = vmatprep.mubr.f32.mxu0 0.0
        %318 = vmatmul.mubr.f32.gmra.mrb[0].mxu0 %v206
        %v319 = vpop.f32.mrb[0].mxu0
        %v320 = vadd.f32 %v197, %v319
        %v321 = vpop.f32.mrb[0].mxu0
        %v322 = vadd.f32 %v201, %v321
        %323 = vmatprep.mubr.f32.mxu0 0.0
        %324 = vmatmul.mubr.f32.gmra.mrb[0].mxu0 %v209
        %v325 = vpop.f32.mrb[0].mxu0
        %v326 = vadd.f32 %v197, %v325
        %v327 = vpop.f32.mrb[0].mxu0
        %v328 = vadd.f32 %v201, %v327
        %329 = vmatprep.mubr.f32.mxu0 0.0
        %330 = vmatmul.mubr.f32.gmra.mrb[0].mxu0 %v212
        %v331 = vpop.f32.mrb[0].mxu0
        %v332 = vadd.f32 %v197, %v331
        %v333 = vpop.f32.mrb[0].mxu0
        %v334 = vadd.f32 %v201, %v333
        %335 = vmatprep.mubr.f32.mxu0 0.0
        %336 = vmatmul.mubr.f32.gmra.mrb[0].mxu0 %v215
        %v337 = vpop.f32.mrb[0].mxu0
        %v338 = vadd.f32 %v197, %v337
        %v339 = vpop.f32.mrb[0].mxu0
        %v340 = vadd.f32 %v201, %v339
        %341 = vmatprep.mubr.f32.mxu0 0.0
        %342 = vmatmul.mubr.f32.gmra.mrb[0].mxu0 %v218
        %v343 = vpop.f32.mrb[0].mxu0
        %v344 = vadd.f32 %v197, %v343
        %v345 = vpop.f32.mrb[0].mxu0
        %v346 = vadd.f32 %v201, %v345
        %347 = vmatprep.mubr.f32.mxu0 0.0
        %348 = vmatmul.mubr.f32.gmra.mrb[0].mxu0 %v221
        %v349 = vpop.f32.mrb[0].mxu0
        %v350 = vadd.f32 %v197, %v349
        %v351 = vpop.f32.mrb[0].mxu0
        %v352 = vadd.f32 %v201, %v351
        %353 = vmatprep.mubr.f32.mxu0 0.0
        %354 = vmatmul.mubr.f32.gmra.mrb[0].mxu0 %v224
        %v355 = vpop.f32.mrb[0].mxu0
        %v356 = vadd.f32 %v197, %v355
        %v357 = vpop.f32.mrb[0].mxu0
        %v358 = vadd.f32 %v201, %v357
        %359 = vmatprep.mubr.f32.mxu0 0.0
        %360 = vmatmul.mubr.f32.gmra.mrb[0].mxu0 %v227
        %v361 = vpop.f32.mrb[0].mxu0
        %v362 = vadd.f32 %v197, %v361
        %v363 = vpop.f32.mrb[0].mxu0
        %v364 = vadd.f32 %v201, %v363
        %365 = vmatprep.mubr.f32.mxu0 0.0
        %366 = vmatmul.mubr.f32.gmra.mrb[0].mxu0 %v230
        %v367 = vpop.f32.mrb[0].mxu0
        %v368 = vadd.f32 %v197, %v367
        %v369 = vpop.f32.mrb[0].mxu0
        %v370 = vadd.f32 %v201, %v369
        %371 = vmatprep.mubr.f32.mxu0 0.0
        %372 = vmatmul.mubr.f32.gmra.mrb[0].mxu0 %v233
        %v373 = vpop.f32.mrb[0].mxu0
        %v374 = vadd.f32 %v197, %v373
        %v375 = vpop.f32.mrb[0].mxu0
        %v376 = vadd.f32 %v201, %v375
        %377 = vmatprep.mubr.f32.mxu0 0.0
        %378 = vmatmul.mubr.f32.gmra.mrb[0].mxu0 %v236
        %v379 = vpop.f32.mrb[0].mxu0
        %v380 = vadd.f32 %v197, %v379
        %v381 = vpop.f32.mrb[0].mxu0
        %v382 = vadd.f32 %v201, %v381
        %383 = vmatprep.mubr.f32.mxu0 0.0
        %384 = vmatmul.mubr.f32.gmra.mrb[0].mxu0 %v239
        %v385 = vpop.f32.mrb[0].mxu0
        %v386 = vadd.f32 %v197, %v385
        %v387 = vpop.f32.mrb[0].mxu0
        %v388 = vadd.f32 %v201, %v387
        %389 = vmatprep.mubr.f32.mxu0 0.0
        %390 = vmatmul.mubr.f32.gmra.mrb[0].mxu0 %v242
        %v391 = vpop.f32.mrb[0].mxu0
        %v392 = vadd.f32 %v197, %v391
        %v393 = vpop.f32.mrb[0].mxu0
        %v394 = vadd.f32 %v201, %v393
        %395 = vmatprep.mubr.f32.mxu0 0.0
        %396 = vmatmul.mubr.f32.gmra.mrb[0].mxu0 %v245
        %v397 = vpop.f32.mrb[0].mxu0
        %v398 = vadd.f32 %v197, %v397
        %v399 = vpop.f32.mrb[0].mxu0
        %v400 = vadd.f32 %v201, %v399
        %401 = vmatprep.mubr.f32.mxu0 0.0
        %402 = vmatmul.mubr.f32.gmra.mrb[0].mxu0 %v248
        %v403 = vpop.f32.mrb[0].mxu0
        %v404 = vadd.f32 %v197, %v403
        %v405 = vpop.f32.mrb[0].mxu0
        %v406 = vadd.f32 %v201, %v405
        %407 = vmatprep.mubr.f32.mxu0 0.0
        %408 = vmatmul.mubr.f32.gmra.mrb[0].mxu0 %v251
        %v409 = vpop.f32.mrb[0].mxu0
        %v410 = vadd.f32 %v197, %v409
        %v411 = vpop.f32.mrb[0].mxu0
        %v412 = vadd.f32 %v201, %v411
        %413 = vdwg.mxu0
        %414 = vst [vmem:[%s164] sm:$0xff] %v320
        %415 = vst [vmem:[%s164 + $0x8] sm:$0xff] %v322
        %416 = vst [vmem:[%s164 + $0x10] sm:$0xff] %v326
        %417 = vst [vmem:[%s164 + $0x18] sm:$0xff] %v328
        %418 = vst [vmem:[%s164 + $0x20] sm:$0xff] %v332
        %419 = vst [vmem:[%s164 + $0x28] sm:$0xff] %v334
        %420 = vst [vmem:[%s164 + $0x30] sm:$0xff] %v338
        %421 = vst [vmem:[%s164 + $0x38] sm:$0xff] %v340
        %422 = vst [vmem:[%s164 + $0x40] sm:$0xff] %v344
        %423 = vst [vmem:[%s164 + $0x48] sm:$0xff] %v346
        %424 = vst [vmem:[%s164 + $0x50] sm:$0xff] %v350
        %425 = vst [vmem:[%s164 + $0x58] sm:$0xff] %v352
        %426 = vst [vmem:[%s164 + $0x60] sm:$0xff] %v356
        %427 = vst [vmem:[%s164 + $0x68] sm:$0xff] %v358
        %428 = vst [vmem:[%s164 + $0x70] sm:$0xff] %v362
        %429 = vst [vmem:[%s164 + $0x78] sm:$0xff] %v364
        %430 = vst [vmem:[%s164 + $0x80] sm:$0xff] %v368
        %431 = vst [vmem:[%s164 + $0x88] sm:$0xff] %v370
        %432 = vst [vmem:[%s164 + $0x90] sm:$0xff] %v374
        %433 = vst [vmem:[%s164 + $0x98] sm:$0xff] %v376
        %434 = vst [vmem:[%s164 + $0xa0] sm:$0xff] %v380
        %435 = vst [vmem:[%s164 + $0xa8] sm:$0xff] %v382
        %436 = vst [vmem:[%s164 + $0xb0] sm:$0xff] %v386
        %437 = vst [vmem:[%s164 + $0xb8] sm:$0xff] %v388
        %438 = vst [vmem:[%s164 + $0xc0] sm:$0xff] %v392
        %439 = vst [vmem:[%s164 + $0xc8] sm:$0xff] %v394
        %440 = vst [vmem:[%s164 + $0xd0] sm:$0xff] %v398
        %441 = vst [vmem:[%s164 + $0xd8] sm:$0xff] %v400
        %442 = vst [vmem:[%s164 + $0xe0] sm:$0xff] %v404
        %443 = vst [vmem:[%s164 + $0xe8] sm:$0xff] %v406
        %444 = vst [vmem:[%s164 + $0xf0] sm:$0xff] %v410
        %445 = vst [vmem:[%s164 + $0xf8] sm:$0xff] %v412
        %s446 = sand.u32 %s93, 1
        %s447 = scalar_lea.sflag [#allocation3], %s446
        %s448 = sand.u32 %s93, 1
        %s449 = smul.addr %s448, 256
        %s450 = scalar_lea.vmem [#allocation2], %s449
        // Predicated region
        $region33: #{tpu_custom_call.1} parent=31 // pred_check
          %p451 = pneg %p103
        $region34: #{tpu_custom_call.1} parent=31 // pred_check_branch
          %453 = sbr.rel (%p451) target = $region36
        $region35: #{tpu_custom_call.1} parent=31 // pred_region
          %s454 = smul.u32 16, %s17
          %s456 = ssub.s32 4096, 4096
          %457 = vsyncadd %s447, %s456
          %s458 = smul.addr %s454, 2
          %s459 = smul.addr %s458, 128
          %s460 = scalar_lea.hbm %s3, %s459
          %s461 = sshll.u32 %s450, 4
          %s462 = int_to_ptr.vmem [resolvable:$true] %s461
          %467 = dma.vmem_to_hbm [thread:$0]  %s462, 4096, %s460, %s447, 256, 256, 16
        $region36: #{tpu_custom_call.1} parent=31 // pred_fallthru
          _
      $region32: #{tpu_custom_call.1} parent=5 // pred_fallthru
        _
      %p468 = scmp.le.s32.totalorder 2, %s12
      // Predicated region
      $region37: #{tpu_custom_call.1} parent=5 // pred_check
        %p469 = pneg %p468
      $region38: #{tpu_custom_call.1} parent=5 // pred_check_branch
        %471 = sbr.rel (%p469) target = $region40
      $region39: #{tpu_custom_call.1} parent=5 // pred_region
        %s472 = ssub.s32 %s12, 2
        // Predicated region
        $region41: #{tpu_custom_call.1} parent=39 // pred_check
          %p473 = pneg %p109
        $region42: #{tpu_custom_call.1} parent=39 // pred_check_branch
          %475 = sbr.rel (%p473) target = $region44
        $region43: #{tpu_custom_call.1} parent=39 // pred_region
          %s476 = sand.u32 %s94, 1
          %s477 = scalar_lea.sflag [#allocation3], %s476
          %s478 = sand.u32 %s94, 1
          %s479 = smul.addr %s478, 256
          %s480 = scalar_lea.vmem [#allocation2], %s479
          %481 = dma.done %s477, 4096
        $region44: #{tpu_custom_call.1} parent=39 // pred_fallthru
          _
      $region40: #{tpu_custom_call.1} parent=5 // pred_fallthru
        _
    $region6: #{tpu_custom_call.1} parent=1 // loop_footer
      %s16 = sadd.s32 1, %s12
    $region7: #{tpu_custom_call.1} parent=1 // loop_footer_branch
      %11 = sbr.rel target = $region3
    $region8: #{tpu_custom_call.1} parent=1 // loop_exit
      _
    %482 = vsyncpa [#allocation3], 1
    %s483 = scalar_lea.sflag [#allocation3], 1
    %484 = vsyncpa %s483, 1

</llo_original>
